<compile_context>
chip_gen: v7x
topology: tpu7x:2x2x1
jax: 0.10.0
libtpu: 0.0.40
codegen_flags: <defaults>
</compile_context>

<pallas_src>
import math
import jax
import jax.numpy as jnp
from jax.experimental import pallas as pl
from jax.experimental.pallas import tpu as pltpu


def _fuse_embed_kernel(u_ref, p_ref, wu_ref, wp_ref, b_ref, o_ref):
    # cat(u, p) @ W + b  ==  u @ W_u + p @ W_p + b   (MXU, f32 accumulation)
    acc = jnp.dot(u_ref[...], wu_ref[...], preferred_element_type=jnp.float32)
    acc = acc + jnp.dot(p_ref[...], wp_ref[...], preferred_element_type=jnp.float32)
    acc = acc + b_ref[...]                      # (1, E) broadcast over rows
    # LeakyReLU(negative_slope=0.2) on the VPU.
    o_ref[...] = jnp.where(acc >= 0.0, acc, 0.2 * acc).astype(o_ref.dtype)


def fuse_embeddings(user_embed, poi_embed, weight, bias, *, block_rows=128):
    """user_embed: (..., U), poi_embed: (..., P), weight: (U+P, U+P) in
    (in_features, out_features) layout (i.e. already transposed vs. torch),
    bias: (U+P,)."""
    u_dim = user_embed.shape[-1]
    p_dim = poi_embed.shape[-1]
    e_dim = u_dim + p_dim
    assert weight.shape == (e_dim, e_dim)
    assert bias.shape == (e_dim,)

    lead_shape = user_embed.shape[:-1]
    u2 = user_embed.reshape(-1, u_dim)
    p2 = poi_embed.reshape(-1, p_dim)
    n = u2.shape[0]

    # Row tile; pad rows up to a multiple of the tile so the BlockSpec last-two
    # dims stay (8,128)-friendly and the grid is exact.
    tm = min(block_rows, max(8, ((n + 7) // 8) * 8))
    n_pad = pl.cdiv(n, tm) * tm
    if n_pad != n:
        pad = n_pad - n
        u2 = jnp.pad(u2, ((0, pad), (0, 0)))
        p2 = jnp.pad(p2, ((0, pad), (0, 0)))

    # Split the weight along its input dim so the concat never materializes.
    w_u = weight[:u_dim, :]          # (U, E)
    w_p = weight[u_dim:, :]          # (P, E)
    bias2d = bias.reshape(1, e_dim)  # 2-D for TPU-friendly broadcast

    grid = (n_pad // tm,)
    out = pl.pallas_call(
        _fuse_embed_kernel,
        out_shape=jax.ShapeDtypeStruct((n_pad, e_dim), user_embed.dtype),
        grid=grid,
        in_specs=[
            pl.BlockSpec((tm, u_dim), lambda i: (i, 0)),    # user rows (streamed)
            pl.BlockSpec((tm, p_dim), lambda i: (i, 0)),    # poi rows (streamed)
            pl.BlockSpec((u_dim, e_dim), lambda i: (0, 0)),  # W_u (resident)
            pl.BlockSpec((p_dim, e_dim), lambda i: (0, 0)),  # W_p (resident)
            pl.BlockSpec((1, e_dim), lambda i: (0, 0)),      # bias (resident)
        ],
        out_specs=pl.BlockSpec((tm, e_dim), lambda i: (i, 0)),
        compiler_params=pltpu.CompilerParams(
            dimension_semantics=("parallel",)),
    )(u2, p2, w_u, w_p, bias2d)

    if n_pad != n:
        out = out[:n]
    return out.reshape(lead_shape + (e_dim,))


if __name__ == "__main__":
    # Small shapes consistent with the module: user/poi embeddings fused into
    # a 128-wide (lane-dense) embedding.
    B, U_DIM, P_DIM = 256, 64, 64
    E_DIM = U_DIM + P_DIM

    key = jax.random.PRNGKey(0)
    k_u, k_p, k_w, k_b = jax.random.split(key, 4)

    # nn.Linear default init: uniform(-1/sqrt(in_f), 1/sqrt(in_f)).
    bound = 1.0 / math.sqrt(E_DIM)
    # Stored as (in_features, out_features), i.e. torch's weight transposed.
    weight = jax.random.uniform(k_w, (E_DIM, E_DIM), jnp.float32, -bound, bound)
    bias = jax.random.uniform(k_b, (E_DIM,), jnp.float32, -bound, bound)

    user_embed = jax.random.normal(k_u, (B, U_DIM), jnp.float32)
    poi_embed = jax.random.normal(k_p, (B, P_DIM), jnp.float32)

    out = fuse_embeddings(user_embed, poi_embed, weight, bias)
    out = jax.block_until_ready(out)

    # Reference in plain JAX (same math as the torch forward).
    x = jnp.concatenate([user_embed, poi_embed], axis=-1)
    lin = x @ weight + bias
    ref = jnp.where(lin >= 0.0, lin, 0.2 * lin)

    assert out.shape == (B, E_DIM)
    assert jnp.allclose(out, ref, atol=1e-5, rtol=1e-5)

    print("KERNEL_OK")
</pallas_src>

<mosaic_0001>
module attributes {stable_mosaic.version = 11 : i64} {
  func.func @_fuse_embed_kernel(%arg0: i32, %arg1: memref<128x64xf32, #tpu.memory_space<vmem>>, %arg2: memref<128x64xf32, #tpu.memory_space<vmem>>, %arg3: memref<64x128xf32, #tpu.memory_space<vmem>>, %arg4: memref<64x128xf32, #tpu.memory_space<vmem>>, %arg5: memref<1x128xf32, #tpu.memory_space<vmem>>, %arg6: memref<128x128xf32, #tpu.memory_space<vmem>>) attributes {dimension_semantics = [#tpu.dimension_semantics<parallel>], iteration_bounds = array<i64: 2>, scalar_prefetch = 0 : i64, scratch_operands = 0 : i64, tpu.core_type = #tpu.core_type<tc>, window_params = [{transform_indices = @transform_0, window_bounds = array<i64: 128, 64>}, {transform_indices = @transform_1, window_bounds = array<i64: 128, 64>}, {pipeline_mode = #tpu.pipeline_mode<synchronous>, transform_indices = @transform_2, window_bounds = array<i64: 64, 128>}, {pipeline_mode = #tpu.pipeline_mode<synchronous>, transform_indices = @transform_3, window_bounds = array<i64: 64, 128>}, {pipeline_mode = #tpu.pipeline_mode<synchronous>, transform_indices = @transform_4, window_bounds = array<i64: 1, 128>}, {transform_indices = @transform_5, window_bounds = array<i64: 128, 128>}]} {
    %c0 = arith.constant 0 : index
    %c0_0 = arith.constant 0 : index
    %0 = vector.load %arg1[%c0, %c0_0] : memref<128x64xf32, #tpu.memory_space<vmem>>, vector<128x64xf32>
    %c0_1 = arith.constant 0 : index
    %c0_2 = arith.constant 0 : index
    %1 = vector.load %arg3[%c0_1, %c0_2] : memref<64x128xf32, #tpu.memory_space<vmem>>, vector<64x128xf32>
    %cst = arith.constant dense<0.000000e+00> : vector<128x128xf32>
    %2 = tpu.matmul %0, %1, %cst {dimension_numbers = #tpu.dot_dimension_numbers<[1], [0], [0], [1], [0, 0, 1, 1], [], []>} : vector<128x64xf32>, vector<64x128xf32>, vector<128x128xf32> -> vector<128x128xf32>
    %c0_3 = arith.constant 0 : index
    %c0_4 = arith.constant 0 : index
    %3 = vector.load %arg2[%c0_3, %c0_4] : memref<128x64xf32, #tpu.memory_space<vmem>>, vector<128x64xf32>
    %c0_5 = arith.constant 0 : index
    %c0_6 = arith.constant 0 : index
    %4 = vector.load %arg4[%c0_5, %c0_6] : memref<64x128xf32, #tpu.memory_space<vmem>>, vector<64x128xf32>
    %cst_7 = arith.constant dense<0.000000e+00> : vector<128x128xf32>
    %5 = tpu.matmul %3, %4, %cst_7 {dimension_numbers = #tpu.dot_dimension_numbers<[1], [0], [0], [1], [0, 0, 1, 1], [], []>} : vector<128x64xf32>, vector<64x128xf32>, vector<128x128xf32> -> vector<128x128xf32>
    %6 = arith.addf %2, %5 : vector<128x128xf32>
    %c0_8 = arith.constant 0 : index
    %c0_9 = arith.constant 0 : index
    %7 = vector.load %arg5[%c0_8, %c0_9] : memref<1x128xf32, #tpu.memory_space<vmem>>, vector<1x128xf32>
    %8 = vector.broadcast %7 : vector<1x128xf32> to vector<128x128xf32>
    %9 = arith.addf %6, %8 : vector<128x128xf32>
    %cst_10 = arith.constant 0.000000e+00 : f32
    %10 = vector.broadcast %cst_10 : f32 to vector<128x128xf32>
    %11 = arith.cmpf oge, %9, %10 : vector<128x128xf32>
    %cst_11 = arith.constant 2.000000e-01 : f32
    %12 = vector.broadcast %cst_11 : f32 to vector<128x128xf32>
    %13 = arith.mulf %12, %9 : vector<128x128xf32>
    %14 = arith.select %11, %9, %13 : vector<128x128xi1>, vector<128x128xf32>
    %c0_12 = arith.constant 0 : index
    %c0_13 = arith.constant 0 : index
    %15 = vector.load %arg6[%c0_12, %c0_13] : memref<128x128xf32, #tpu.memory_space<vmem>>, vector<128x128xf32>
    tpu.vector_store %arg6[%c0_12, %c0_13], %14 {strides = array<i32>} : memref<128x128xf32, #tpu.memory_space<vmem>>, vector<128x128xf32>,
    return
  }
  func.func @transform_0(%arg0: i32) -> (i32, i32) {
    %c0_i32 = arith.constant 0 : i32
    %c0_i32_0 = arith.constant 0 : i32
    return %arg0, %c0_i32 : i32, i32
  }
  func.func @transform_1(%arg0: i32) -> (i32, i32) {
    %c0_i32 = arith.constant 0 : i32
    %c0_i32_0 = arith.constant 0 : i32
    return %arg0, %c0_i32 : i32, i32
  }
  func.func @transform_2(%arg0: i32) -> (i32, i32) {
    %c0_i32 = arith.constant 0 : i32
    %c0_i32_0 = arith.constant 0 : i32
    %c0_i32_1 = arith.constant 0 : i32
    return %c0_i32, %c0_i32_0 : i32, i32
  }
  func.func @transform_3(%arg0: i32) -> (i32, i32) {
    %c0_i32 = arith.constant 0 : i32
    %c0_i32_0 = arith.constant 0 : i32
    %c0_i32_1 = arith.constant 0 : i32
    return %c0_i32, %c0_i32_0 : i32, i32
  }
  func.func @transform_4(%arg0: i32) -> (i32, i32) {
    %c0_i32 = arith.constant 0 : i32
    %c0_i32_0 = arith.constant 0 : i32
    %c0_i32_1 = arith.constant 0 : i32
    return %c0_i32, %c0_i32_0 : i32, i32
  }
  func.func @transform_5(%arg0: i32) -> (i32, i32) {
    %c0_i32 = arith.constant 0 : i32
    %c0_i32_0 = arith.constant 0 : i32
    return %arg0, %c0_i32 : i32, i32
  }
}

</mosaic_0001>

<llo_original>
// kernel: tpu_custom_call.1
$region0: #{tpu_custom_call.1}
  #allocation0 [shape = 'u32[]', space=smem, size = 0x4, offset = 0x4, fixed_abs, tag = 'smem constant byte address 0x4 - core index']
  #allocation1 [shape = 'u32[144,128]{1,0:T(1,128)}', space=vmem, size = 0x12000, scoped, tag = 'internal scratch']
  %s0 = inlined_call_operand.vmem [shape: f32[256,64], index: 0, kind: input, shape index: {}]
  %s1 = inlined_call_operand.vmem [shape: f32[256,64], index: 1, kind: input, shape index: {}]
  %s2 = inlined_call_operand.vmem [shape: f32[64,128], index: 2, kind: input, shape index: {}]
  %s3 = inlined_call_operand.vmem [shape: f32[64,128], index: 3, kind: input, shape index: {}]
  %s4 = inlined_call_operand.vmem [shape: f32[1,128], index: 4, kind: input, shape index: {}]
  %s5 = inlined_call_operand.hbm [shape: f32[256,128], index: 5, kind: output, shape index: {}]
  %s6 = sld [smem:[#allocation0]]
  $region53: #{tpu_custom_call.1} parent=0
    _
  %s8 = ssub.s32 1, %s6
  %s9 = scalar_select 0, %s8, %s6
  $region1: #{tpu_custom_call.1} parent=0
    #allocation2 [shape = 'u8[131072]{0}', space=vmem, size = 0x20000, scoped, tag = 'output window, operand 0']
    #allocation3 [shape = 's32[2]{0}', space=sflag, size = 0x8, scoped, tag = 'scoped memory for tpu_custom_call.1']
    %10 = vsyncpa [#allocation3], 0
    %s11 = scalar_lea.sflag [#allocation3], 1
    %12 = vsyncpa %s11, 0
    loop: start=0, step=1, limit=4
    $region2: #{tpu_custom_call.1} parent=1 // loop_pre_header
      _
    $region3: #{tpu_custom_call.1} parent=1 // loop_header
      %s14 = sphi 0, %s18
      %p15 = scmp.ge.s32.totalorder %s14, 4
      %s24 = sphi 0, %s26
      %s27 = sphi 0, %s24
      %s28 = sphi 0, %s27
      %s44 = sphi 0, %s28
      %s50 = sphi 0, %s52
      %s53 = sphi 0, %s50
      %s54 = sphi 0, %s53
      %s70 = sphi 0, %s54
      %s74 = sphi 0, %s74
      %s76 = sphi 0, %s74
      %s77 = sphi 0, %s76
      %s91 = sphi 0, %s77
      %s95 = sphi 0, %s95
      %s97 = sphi 0, %s95
      %s98 = sphi 0, %s97
      %s112 = sphi 0, %s98
      %s116 = sphi 0, %s116
      %s118 = sphi 0, %s116
      %s119 = sphi 0, %s118
      %s133 = sphi 0, %s119
      %s139 = sphi 0, %s141
      %s142 = sphi 0, %s139
      %s143 = sphi 0, %s142
      %s159 = sphi 0, %s143
    $region4: #{tpu_custom_call.1} parent=1 // loop_header_branch
      %17 = sbr.rel (%p15) target = $region8
    $region5: #{tpu_custom_call.1} parent=1 // loop_body
      %s19 = ssub.s32 %s14, 1
      %s20 = ssub.s32 %s14, 2
      %s21 = sadd.s32 %s14, 1
      %s22 = ssub.s32 %s14, %s21
      %p23 = scmp.eq.s32.totalorder %s22, 0
      %s25 = sadd.s32 %s24, 1
      %s26 = scalar_select %p23, %s24, %s25
      %p29 = pneg %p23
      %p30 = scmp.eq.s32.totalorder %s14, 1
      %p31 = por %p29, %p30
      %p32 = scmp.ne.s32.totalorder %s24, %s27
      %p33 = scmp.eq.s32.totalorder %s14, 0
      %p34 = por %p32, %p33
      %p35 = scmp.ne.s32.totalorder %s24, %s27
      %p36 = scmp.eq.s32.totalorder %s19, 1
      %p37 = por %p35, %p36
      %p38 = scmp.ne.s32.totalorder %s27, %s28
      %p39 = scmp.eq.s32.totalorder %s19, 0
      %p40 = por %p38, %p39
      %p41 = scmp.ne.s32.totalorder %s27, %s28
      %p42 = scmp.eq.s32.totalorder %s20, 1
      %p43 = por %p41, %p42
      %p45 = scmp.ne.s32.totalorder %s28, %s44
      %p46 = scmp.eq.s32.totalorder %s20, 0
      %p47 = por %p45, %p46
      %s48 = ssub.s32 %s14, %s21
      %p49 = scmp.eq.s32.totalorder %s48, 0
      %s51 = sadd.s32 %s50, 1
      %s52 = scalar_select %p49, %s50, %s51
      %p55 = pneg %p49
      %p56 = scmp.eq.s32.totalorder %s14, 1
      %p57 = por %p55, %p56
      %p58 = scmp.ne.s32.totalorder %s50, %s53
      %p59 = scmp.eq.s32.totalorder %s14, 0
      %p60 = por %p58, %p59
      %p61 = scmp.ne.s32.totalorder %s50, %s53
      %p62 = scmp.eq.s32.totalorder %s19, 1
      %p63 = por %p61, %p62
      %p64 = scmp.ne.s32.totalorder %s53, %s54
      %p65 = scmp.eq.s32.totalorder %s19, 0
      %p66 = por %p64, %p65
      %p67 = scmp.ne.s32.totalorder %s53, %s54
      %p68 = scmp.eq.s32.totalorder %s20, 1
      %p69 = por %p67, %p68
      %p71 = scmp.ne.s32.totalorder %s54, %s70
      %p72 = scmp.eq.s32.totalorder %s20, 0
      %p73 = por %p71, %p72
      %s75 = sadd.s32 %s74, 1
      %p78 = scmp.eq.s32.totalorder %s14, 1
      %p79 = scmp.ne.s32.totalorder %s74, %s76
      %p80 = scmp.eq.s32.totalorder %s14, 0
      %p81 = por %p79, %p80
      %p82 = scmp.ne.s32.totalorder %s74, %s76
      %p83 = scmp.eq.s32.totalorder %s19, 1
      %p84 = por %p82, %p83
      %p85 = scmp.ne.s32.totalorder %s76, %s77
      %p86 = scmp.eq.s32.totalorder %s19, 0
      %p87 = por %p85, %p86
      %p88 = scmp.ne.s32.totalorder %s76, %s77
      %p89 = scmp.eq.s32.totalorder %s20, 1
      %p90 = por %p88, %p89
      %p92 = scmp.ne.s32.totalorder %s77, %s91
      %p93 = scmp.eq.s32.totalorder %s20, 0
      %p94 = por %p92, %p93
      %s96 = sadd.s32 %s95, 1
      %p99 = scmp.eq.s32.totalorder %s14, 1
      %p100 = scmp.ne.s32.totalorder %s95, %s97
      %p101 = scmp.eq.s32.totalorder %s14, 0
      %p102 = por %p100, %p101
      %p103 = scmp.ne.s32.totalorder %s95, %s97
      %p104 = scmp.eq.s32.totalorder %s19, 1
      %p105 = por %p103, %p104
      %p106 = scmp.ne.s32.totalorder %s97, %s98
      %p107 = scmp.eq.s32.totalorder %s19, 0
      %p108 = por %p106, %p107
      %p109 = scmp.ne.s32.totalorder %s97, %s98
      %p110 = scmp.eq.s32.totalorder %s20, 1
      %p111 = por %p109, %p110
      %p113 = scmp.ne.s32.totalorder %s98, %s112
      %p114 = scmp.eq.s32.totalorder %s20, 0
      %p115 = por %p113, %p114
      %s117 = sadd.s32 %s116, 1
      %p120 = scmp.eq.s32.totalorder %s14, 1
      %p121 = scmp.ne.s32.totalorder %s116, %s118
      %p122 = scmp.eq.s32.totalorder %s14, 0
      %p123 = por %p121, %p122
      %p124 = scmp.ne.s32.totalorder %s116, %s118
      %p125 = scmp.eq.s32.totalorder %s19, 1
      %p126 = por %p124, %p125
      %p127 = scmp.ne.s32.totalorder %s118, %s119
      %p128 = scmp.eq.s32.totalorder %s19, 0
      %p129 = por %p127, %p128
      %p130 = scmp.ne.s32.totalorder %s118, %s119
      %p131 = scmp.eq.s32.totalorder %s20, 1
      %p132 = por %p130, %p131
      %p134 = scmp.ne.s32.totalorder %s119, %s133
      %p135 = scmp.eq.s32.totalorder %s20, 0
      %p136 = por %p134, %p135
      %s137 = ssub.s32 %s14, %s21
      %p138 = scmp.eq.s32.totalorder %s137, 0
      %s140 = sadd.s32 %s139, 1
      %s141 = scalar_select %p138, %s139, %s140
      %p144 = pneg %p138
      %p145 = scmp.eq.s32.totalorder %s14, 1
      %p146 = por %p144, %p145
      %p147 = scmp.ne.s32.totalorder %s139, %s142
      %p148 = scmp.eq.s32.totalorder %s14, 0
      %p149 = por %p147, %p148
      %p150 = scmp.ne.s32.totalorder %s139, %s142
      %p151 = scmp.eq.s32.totalorder %s19, 1
      %p152 = por %p150, %p151
      %p153 = scmp.ne.s32.totalorder %s142, %s143
      %p154 = scmp.eq.s32.totalorder %s19, 0
      %p155 = por %p153, %p154
      %p156 = scmp.ne.s32.totalorder %s142, %s143
      %p157 = scmp.eq.s32.totalorder %s20, 1
      %p158 = por %p156, %p157
      %p160 = scmp.ne.s32.totalorder %s143, %s159
      %p161 = scmp.eq.s32.totalorder %s20, 0
      %p162 = por %p160, %p161
      %p163 = scmp.le.s32.totalorder 1, %s14
      %p164 = scmp.lt.s32.totalorder %s14, 3
      %p165 = pnand %p163, %p164
      %p166 = pneg %p165
      // Predicated region
      $region9: #{tpu_custom_call.1} parent=5 // pred_check
        _
      $region10: #{tpu_custom_call.1} parent=5 // pred_check_branch
        %168 = sbr.rel (%p165) target = $region12
      $region11: #{tpu_custom_call.1} parent=5 // pred_region
        %s169 = ssub.s32 %s14, 1
        // Predicated region
        $region13: #{tpu_custom_call.1} parent=11 // pred_check
          %p170 = pneg %p87
        $region14: #{tpu_custom_call.1} parent=11 // pred_check_branch
          %172 = sbr.rel (%p170) target = $region16
        $region15: #{tpu_custom_call.1} parent=11 // pred_region
          _
        $region16: #{tpu_custom_call.1} parent=11 // pred_fallthru
          _
        // Predicated region
        $region17: #{tpu_custom_call.1} parent=11 // pred_check
          %p173 = pneg %p108
        $region18: #{tpu_custom_call.1} parent=11 // pred_check_branch
          %175 = sbr.rel (%p173) target = $region20
        $region19: #{tpu_custom_call.1} parent=11 // pred_region
          _
        $region20: #{tpu_custom_call.1} parent=11 // pred_fallthru
          _
        // Predicated region
        $region21: #{tpu_custom_call.1} parent=11 // pred_check
          %p176 = pneg %p129
        $region22: #{tpu_custom_call.1} parent=11 // pred_check_branch
          %178 = sbr.rel (%p176) target = $region24
        $region23: #{tpu_custom_call.1} parent=11 // pred_region
          _
        $region24: #{tpu_custom_call.1} parent=11 // pred_fallthru
          _
      $region12: #{tpu_custom_call.1} parent=5 // pred_fallthru
        _
      %p179 = scmp.lt.s32.totalorder %s14, 2
      // Predicated region
      $region25: #{tpu_custom_call.1} parent=5 // pred_check
        %p180 = pneg %p179
      $region26: #{tpu_custom_call.1} parent=5 // pred_check_branch
        %182 = sbr.rel (%p180) target = $region28
      $region27: #{tpu_custom_call.1} parent=5 // pred_region
        // Predicated region
        $region29: #{tpu_custom_call.1} parent=27 // pred_check
          %p183 = pneg %p34
        $region30: #{tpu_custom_call.1} parent=27 // pred_check_branch
          %185 = sbr.rel (%p183) target = $region32
        $region31: #{tpu_custom_call.1} parent=27 // pred_region
          %s186 = smul.u32 16, %s14
          %p187 = scmp.lt.s32.totalorder %s186, 31
          %s188 = scalar_select %p187, %s186, 31
          %s189 = smul.addr %s188, 8
          %s190 = scalar_lea.vmem %s0, %s189
          %s191 = smul.u32 16, %s14
        $region32: #{tpu_custom_call.1} parent=27 // pred_fallthru
          _
        // Predicated region
        $region33: #{tpu_custom_call.1} parent=27 // pred_check
          %p192 = pneg %p60
        $region34: #{tpu_custom_call.1} parent=27 // pred_check_branch
          %194 = sbr.rel (%p192) target = $region36
        $region35: #{tpu_custom_call.1} parent=27 // pred_region
          %s195 = smul.u32 16, %s14
          %p196 = scmp.lt.s32.totalorder %s195, 31
          %s197 = scalar_select %p196, %s195, 31
          %s198 = smul.addr %s197, 8
          %s199 = scalar_lea.vmem %s1, %s198
          %s200 = smul.u32 16, %s14
        $region36: #{tpu_custom_call.1} parent=27 // pred_fallthru
          _
      $region28: #{tpu_custom_call.1} parent=5 // pred_fallthru
        _
      %p201 = scmp.le.s32.totalorder 1, %s14
      %p202 = scmp.lt.s32.totalorder %s14, 3
      %p203 = pnand %p201, %p202
      %p204 = pneg %p203
      // Predicated region
      $region37: #{tpu_custom_call.1} parent=5 // pred_check
        _
      $region38: #{tpu_custom_call.1} parent=5 // pred_check_branch
        %206 = sbr.rel (%p203) target = $region40
      $region39: #{tpu_custom_call.1} parent=5 // pred_region
        %s207 = ssub.s32 %s14, 1
        %s208 = smul.u32 16, %s19
        %p209 = scmp.lt.s32.totalorder %s208, 31
        %s210 = scalar_select %p209, %s208, 31
        %s211 = smul.addr %s210, 8
        %s212 = scalar_lea.vmem %s0, %s211
        %p213 = pneg %p40
        %p214 = pneg %p37
        %s215 = smul.u32 16, %s19
        %p216 = scmp.lt.s32.totalorder %s215, 31
        %s217 = scalar_select %p216, %s215, 31
        %s218 = smul.addr %s217, 8
        %s219 = scalar_lea.vmem %s1, %s218
        %p220 = pneg %p66
        %p221 = pneg %p63
        %p222 = pneg %p87
        %p223 = pneg %p84
        %p224 = pneg %p108
        %p225 = pneg %p105
        %p226 = pneg %p129
        %p227 = pneg %p126
        %p228 = pneg %p155
        %p229 = pneg %p152
        %s230 = sand.u32 %s142, 1
        %s231 = scalar_lea.sflag [#allocation3], %s230
        %s232 = sand.u32 %s142, 1
        %s233 = smul.addr %s232, 128
        %s234 = scalar_lea.vmem [#allocation2], %s233
        %s235 = smul.u32 16, %s19
        %p236 = scmp.lt.s32.totalorder %s235, 31
        %s237 = scalar_select %p236, %s235, 31
        %s238 = smul.addr %s237, 8
        %s239 = scalar_lea.vmem %s0, %s238
        %s240 = smul.u32 16, %s19
        %s241 = smul.u32 16, %s19
        %p242 = scmp.lt.s32.totalorder %s241, 31
        %s243 = scalar_select %p242, %s241, 31
        %s244 = smul.addr %s243, 8
        %s245 = scalar_lea.vmem %s1, %s244
        %s246 = smul.u32 16, %s19
        %s247 = smul.u32 16, %s19
        %v248 = vld [vmem:[%s239] sm:$0xff]
        %v249 = vld [vmem:[%s239 + $0x8] sm:$0xff]
        %v250 = vld [vmem:[%s239 + $0x10] sm:$0xff]
        %v251 = vld [vmem:[%s239 + $0x18] sm:$0xff]
        %v252 = vld [vmem:[%s239 + $0x20] sm:$0xff]
        %v253 = vld [vmem:[%s239 + $0x28] sm:$0xff]
        %v254 = vld [vmem:[%s239 + $0x30] sm:$0xff]
        %v255 = vld [vmem:[%s239 + $0x38] sm:$0xff]
        %v256 = vld [vmem:[%s239 + $0x40] sm:$0xff]
        %v257 = vld [vmem:[%s239 + $0x48] sm:$0xff]
        %v258 = vld [vmem:[%s239 + $0x50] sm:$0xff]
        %v259 = vld [vmem:[%s239 + $0x58] sm:$0xff]
        %v260 = vld [vmem:[%s239 + $0x60] sm:$0xff]
        %v261 = vld [vmem:[%s239 + $0x68] sm:$0xff]
        %v262 = vld [vmem:[%s239 + $0x70] sm:$0xff]
        %v263 = vld [vmem:[%s239 + $0x78] sm:$0xff]
        %v264 = vld [vmem:[%s2] sm:$0xff]
        %v265 = vld [vmem:[%s2 + $0x8] sm:$0xff]
        %v266 = vld [vmem:[%s2 + $0x10] sm:$0xff]
        %v267 = vld [vmem:[%s2 + $0x18] sm:$0xff]
        %v268 = vld [vmem:[%s2 + $0x20] sm:$0xff]
        %v269 = vld [vmem:[%s2 + $0x28] sm:$0xff]
        %v270 = vld [vmem:[%s2 + $0x30] sm:$0xff]
        %v271 = vld [vmem:[%s2 + $0x38] sm:$0xff]
        %v272 = vld [vmem:[%s245] sm:$0xff]
        %v273 = vld [vmem:[%s245 + $0x8] sm:$0xff]
        %v274 = vld [vmem:[%s245 + $0x10] sm:$0xff]
        %v275 = vld [vmem:[%s245 + $0x18] sm:$0xff]
        %v276 = vld [vmem:[%s245 + $0x20] sm:$0xff]
        %v277 = vld [vmem:[%s245 + $0x28] sm:$0xff]
        %v278 = vld [vmem:[%s245 + $0x30] sm:$0xff]
        %v279 = vld [vmem:[%s245 + $0x38] sm:$0xff]
        %v280 = vld [vmem:[%s245 + $0x40] sm:$0xff]
        %v281 = vld [vmem:[%s245 + $0x48] sm:$0xff]
        %v282 = vld [vmem:[%s245 + $0x50] sm:$0xff]
        %v283 = vld [vmem:[%s245 + $0x58] sm:$0xff]
        %v284 = vld [vmem:[%s245 + $0x60] sm:$0xff]
        %v285 = vld [vmem:[%s245 + $0x68] sm:$0xff]
        %v286 = vld [vmem:[%s245 + $0x70] sm:$0xff]
        %v287 = vld [vmem:[%s245 + $0x78] sm:$0xff]
        %v288 = vld [vmem:[%s3] sm:$0xff]
        %v289 = vld [vmem:[%s3 + $0x8] sm:$0xff]
        %v290 = vld [vmem:[%s3 + $0x10] sm:$0xff]
        %v291 = vld [vmem:[%s3 + $0x18] sm:$0xff]
        %v292 = vld [vmem:[%s3 + $0x20] sm:$0xff]
        %v293 = vld [vmem:[%s3 + $0x28] sm:$0xff]
        %v294 = vld [vmem:[%s3 + $0x30] sm:$0xff]
        %v295 = vld [vmem:[%s3 + $0x38] sm:$0xff]
        %vm296 = vcmask 523264
        %v298 = vsel %vm296, %v272, 0
        %v301 = vsel %vm296, %v273, 0
        %v304 = vsel %vm296, %v274, 0
        %v307 = vsel %vm296, %v275, 0
        %v310 = vsel %vm296, %v276, 0
        %v313 = vsel %vm296, %v277, 0
        %v316 = vsel %vm296, %v278, 0
        %v319 = vsel %vm296, %v279, 0
        %v322 = vsel %vm296, %v280, 0
        %v325 = vsel %vm296, %v281, 0
        %v328 = vsel %vm296, %v282, 0
        %v331 = vsel %vm296, %v283, 0
        %v334 = vsel %vm296, %v284, 0
        %v337 = vsel %vm296, %v285, 0
        %v340 = vsel %vm296, %v286, 0
        %v343 = vsel %vm296, %v287, 0
        %345 = vmatprep.subr.mxu0 0.0
        %346 = vmatpush1.msra.mxu0 %v288
        %347 = vmatprep.subr.mxu0 0.0
        %348 = vmatpush1.msra.mxu0 %v289
        %349 = vmatprep.subr.mxu0 0.0
        %350 = vmatpush1.msra.mxu0 %v290
        %351 = vmatprep.subr.mxu0 0.0
        %352 = vmatpush1.msra.mxu0 %v291
        %353 = vmatprep.subr.mxu0 0.0
        %354 = vmatpush1.msra.mxu0 %v292
        %355 = vmatprep.subr.mxu0 0.0
        %356 = vmatpush1.msra.mxu0 %v293
        %357 = vmatprep.subr.mxu0 0.0
        %358 = vmatpush1.msra.mxu0 %v294
        %359 = vmatprep.subr.mxu0 0.0
        %360 = vmatpush1.msra.mxu0 %v295
        %361 = vmatprep.subr.mxu0 0.0
        %362 = vmatpush1.msra.mxu0 0.0
        %363 = vmatprep.subr.mxu0 0.0
        %364 = vmatpush1.msra.mxu0 0.0
        %365 = vmatprep.subr.mxu0 0.0
        %366 = vmatpush1.msra.mxu0 0.0
        %367 = vmatprep.subr.mxu0 0.0
        %368 = vmatpush1.msra.mxu0 0.0
        %369 = vmatprep.subr.mxu0 0.0
        %370 = vmatpush1.msra.mxu0 0.0
        %371 = vmatprep.subr.mxu0 0.0
        %372 = vmatpush1.msra.mxu0 0.0
        %373 = vmatprep.subr.mxu0 0.0
        %374 = vmatpush1.msra.mxu0 0.0
        %375 = vmatprep.subr.mxu0 0.0
        %376 = vmatpush1.msra.mxu0 0.0
        %377 = vmatprep.subr.mxu0 0.0
        %378 = vmatpush1.msra.mxu0 0.0
        %379 = vmatprep.subr.mxu0 0.0
        %380 = vmatpush1.msra.mxu0 0.0
        %381 = vmatprep.subr.mxu0 0.0
        %382 = vmatpush1.msra.mxu0 0.0
        %383 = vmatprep.subr.mxu0 0.0
        %384 = vmatpush1.msra.mxu0 0.0
        %385 = vmatprep.subr.mxu0 0.0
        %386 = vmatpush1.msra.mxu0 0.0
        %387 = vmatprep.subr.mxu0 0.0
        %388 = vmatpush1.msra.mxu0 0.0
        %389 = vmatprep.subr.mxu0 0.0
        %390 = vmatpush1.msra.mxu0 0.0
        %391 = vmatprep.subr.mxu0 0.0
        %392 = vmatpush1.msra.mxu0 0.0
        %393 = vmatprep.subr.mxu0 0.0
        %394 = vmatpush1.msra.mxu0 0.0
        %395 = vmatprep.subr.mxu0 0.0
        %396 = vmatpush1.msra.mxu0 0.0
        %397 = vmatprep.subr.mxu0 0.0
        %398 = vmatpush1.msra.mxu0 0.0
        %399 = vmatprep.subr.mxu0 0.0
        %400 = vmatpush1.msra.mxu0 0.0
        %401 = vmatprep.subr.mxu0 0.0
        %402 = vmatpush1.msra.mxu0 0.0
        %403 = vmatprep.subr.mxu0 0.0
        %404 = vmatpush1.msra.mxu0 0.0
        %405 = vmatprep.subr.mxu0 0.0
        %406 = vmatpush1.msra.mxu0 0.0
        %407 = vmatprep.subr.mxu0 0.0
        %408 = vmatpush1.msra.mxu0 0.0
        %409 = vmatprep.mubr.f32.mxu0 0.0
        %410 = vmatmul.mubr.f32.gmra.mrb[0].mxu0 %v298
        %v411 = vpop.f32.mrb[0].mxu0
        %v412 = vadd.f32 0.0, %v411
        %v413 = vpop.f32.mrb[0].mxu0
        %414 = vmatprep.mubr.f32.mxu0 0.0
        %415 = vmatmul.mubr.f32.gmra.mrb[0].mxu0 %v301
        %v416 = vpop.f32.mrb[0].mxu0
        %v417 = vadd.f32 0.0, %v416
        %v418 = vpop.f32.mrb[0].mxu0
        %419 = vmatprep.mubr.f32.mxu0 0.0
        %420 = vmatmul.mubr.f32.gmra.mrb[0].mxu0 %v304
        %v421 = vpop.f32.mrb[0].mxu0
        %v422 = vadd.f32 0.0, %v421
        %v423 = vpop.f32.mrb[0].mxu0
        %424 = vmatprep.mubr.f32.mxu0 0.0
        %425 = vmatmul.mubr.f32.gmra.mrb[0].mxu0 %v307
        %v426 = vpop.f32.mrb[0].mxu0
        %v427 = vadd.f32 0.0, %v426
        %v428 = vpop.f32.mrb[0].mxu0
        %429 = vmatprep.mubr.f32.mxu0 0.0
        %430 = vmatmul.mubr.f32.gmra.mrb[0].mxu0 %v310
        %v431 = vpop.f32.mrb[0].mxu0
        %v432 = vadd.f32 0.0, %v431
        %v433 = vpop.f32.mrb[0].mxu0
        %434 = vmatprep.mubr.f32.mxu0 0.0
        %435 = vmatmul.mubr.f32.gmra.mrb[0].mxu0 %v313
        %v436 = vpop.f32.mrb[0].mxu0
        %v437 = vadd.f32 0.0, %v436
        %v438 = vpop.f32.mrb[0].mxu0
        %439 = vmatprep.mubr.f32.mxu0 0.0
        %440 = vmatmul.mubr.f32.gmra.mrb[0].mxu0 %v316
        %v441 = vpop.f32.mrb[0].mxu0
        %v442 = vadd.f32 0.0, %v441
        %v443 = vpop.f32.mrb[0].mxu0
        %444 = vmatprep.mubr.f32.mxu0 0.0
        %445 = vmatmul.mubr.f32.gmra.mrb[0].mxu0 %v319
        %v446 = vpop.f32.mrb[0].mxu0
        %v447 = vadd.f32 0.0, %v446
        %v448 = vpop.f32.mrb[0].mxu0
        %449 = vmatprep.mubr.f32.mxu0 0.0
        %450 = vmatmul.mubr.f32.gmra.mrb[0].mxu0 %v322
        %v451 = vpop.f32.mrb[0].mxu0
        %v452 = vadd.f32 0.0, %v451
        %v453 = vpop.f32.mrb[0].mxu0
        %454 = vmatprep.mubr.f32.mxu0 0.0
        %455 = vmatmul.mubr.f32.gmra.mrb[0].mxu0 %v325
        %v456 = vpop.f32.mrb[0].mxu0
        %v457 = vadd.f32 0.0, %v456
        %v458 = vpop.f32.mrb[0].mxu0
        %459 = vmatprep.mubr.f32.mxu0 0.0
        %460 = vmatmul.mubr.f32.gmra.mrb[0].mxu0 %v328
        %v461 = vpop.f32.mrb[0].mxu0
        %v462 = vadd.f32 0.0, %v461
        %v463 = vpop.f32.mrb[0].mxu0
        %464 = vmatprep.mubr.f32.mxu0 0.0
        %465 = vmatmul.mubr.f32.gmra.mrb[0].mxu0 %v331
        %v466 = vpop.f32.mrb[0].mxu0
        %v467 = vadd.f32 0.0, %v466
        %v468 = vpop.f32.mrb[0].mxu0
        %469 = vmatprep.mubr.f32.mxu0 0.0
        %470 = vmatmul.mubr.f32.gmra.mrb[0].mxu0 %v334
        %v471 = vpop.f32.mrb[0].mxu0
        %v472 = vadd.f32 0.0, %v471
        %v473 = vpop.f32.mrb[0].mxu0
        %474 = vmatprep.mubr.f32.mxu0 0.0
        %475 = vmatmul.mubr.f32.gmra.mrb[0].mxu0 %v337
        %v476 = vpop.f32.mrb[0].mxu0
        %v477 = vadd.f32 0.0, %v476
        %v478 = vpop.f32.mrb[0].mxu0
        %479 = vmatprep.mubr.f32.mxu0 0.0
        %480 = vmatmul.mubr.f32.gmra.mrb[0].mxu0 %v340
        %v481 = vpop.f32.mrb[0].mxu0
        %v482 = vadd.f32 0.0, %v481
        %v483 = vpop.f32.mrb[0].mxu0
        %484 = vmatprep.mubr.f32.mxu0 0.0
        %485 = vmatmul.mubr.f32.gmra.mrb[0].mxu0 %v343
        %v486 = vpop.f32.mrb[0].mxu0
        %v487 = vadd.f32 0.0, %v486
        %v488 = vpop.f32.mrb[0].mxu0
        %489 = vdwg.mxu0
        %v491 = vsel %vm296, %v248, 0
        %v494 = vsel %vm296, %v249, 0
        %v497 = vsel %vm296, %v250, 0
        %v500 = vsel %vm296, %v251, 0
        %v503 = vsel %vm296, %v252, 0
        %v506 = vsel %vm296, %v253, 0
        %v509 = vsel %vm296, %v254, 0
        %v512 = vsel %vm296, %v255, 0
        %v515 = vsel %vm296, %v256, 0
        %v518 = vsel %vm296, %v257, 0
        %v521 = vsel %vm296, %v258, 0
        %v524 = vsel %vm296, %v259, 0
        %v527 = vsel %vm296, %v260, 0
        %v530 = vsel %vm296, %v261, 0
        %v533 = vsel %vm296, %v262, 0
        %v536 = vsel %vm296, %v263, 0
        %538 = vmatprep.subr.mxu0 0.0
        %539 = vmatpush1.msra.mxu0 %v264
        %540 = vmatprep.subr.mxu0 0.0
        %541 = vmatpush1.msra.mxu0 %v265
        %542 = vmatprep.subr.mxu0 0.0
        %543 = vmatpush1.msra.mxu0 %v266
        %544 = vmatprep.subr.mxu0 0.0
        %545 = vmatpush1.msra.mxu0 %v267
        %546 = vmatprep.subr.mxu0 0.0
        %547 = vmatpush1.msra.mxu0 %v268
        %548 = vmatprep.subr.mxu0 0.0
        %549 = vmatpush1.msra.mxu0 %v269
        %550 = vmatprep.subr.mxu0 0.0
        %551 = vmatpush1.msra.mxu0 %v270
        %552 = vmatprep.subr.mxu0 0.0
        %553 = vmatpush1.msra.mxu0 %v271
        %554 = vmatprep.subr.mxu0 0.0
        %555 = vmatpush1.msra.mxu0 0.0
        %556 = vmatprep.subr.mxu0 0.0
        %557 = vmatpush1.msra.mxu0 0.0
        %558 = vmatprep.subr.mxu0 0.0
        %559 = vmatpush1.msra.mxu0 0.0
        %560 = vmatprep.subr.mxu0 0.0
        %561 = vmatpush1.msra.mxu0 0.0
        %562 = vmatprep.subr.mxu0 0.0
        %563 = vmatpush1.msra.mxu0 0.0
        %564 = vmatprep.subr.mxu0 0.0
        %565 = vmatpush1.msra.mxu0 0.0
        %566 = vmatprep.subr.mxu0 0.0
        %567 = vmatpush1.msra.mxu0 0.0
        %568 = vmatprep.subr.mxu0 0.0
        %569 = vmatpush1.msra.mxu0 0.0
        %570 = vmatprep.subr.mxu0 0.0
        %571 = vmatpush1.msra.mxu0 0.0
        %572 = vmatprep.subr.mxu0 0.0
        %573 = vmatpush1.msra.mxu0 0.0
        %574 = vmatprep.subr.mxu0 0.0
        %575 = vmatpush1.msra.mxu0 0.0
        %576 = vmatprep.subr.mxu0 0.0
        %577 = vmatpush1.msra.mxu0 0.0
        %578 = vmatprep.subr.mxu0 0.0
        %579 = vmatpush1.msra.mxu0 0.0
        %580 = vmatprep.subr.mxu0 0.0
        %581 = vmatpush1.msra.mxu0 0.0
        %582 = vmatprep.subr.mxu0 0.0
        %583 = vmatpush1.msra.mxu0 0.0
        %584 = vmatprep.subr.mxu0 0.0
        %585 = vmatpush1.msra.mxu0 0.0
        %586 = vmatprep.subr.mxu0 0.0
        %587 = vmatpush1.msra.mxu0 0.0
        %588 = vmatprep.subr.mxu0 0.0
        %589 = vmatpush1.msra.mxu0 0.0
        %590 = vmatprep.subr.mxu0 0.0
        %591 = vmatpush1.msra.mxu0 0.0
        %592 = vmatprep.subr.mxu0 0.0
        %593 = vmatpush1.msra.mxu0 0.0
        %594 = vmatprep.subr.mxu0 0.0
        %595 = vmatpush1.msra.mxu0 0.0
        %596 = vmatprep.subr.mxu0 0.0
        %597 = vmatpush1.msra.mxu0 0.0
        %598 = vmatprep.subr.mxu0 0.0
        %599 = vmatpush1.msra.mxu0 0.0
        %600 = vmatprep.subr.mxu0 0.0
        %601 = vmatpush1.msra.mxu0 0.0
        %602 = vmatprep.mubr.f32.mxu0 0.0
        %603 = vmatmul.mubr.f32.gmra.mrb[0].mxu0 %v491
        %v604 = vpop.f32.mrb[0].mxu0
        %v605 = vadd.f32 %v412, %v604
        %v606 = vpop.f32.mrb[0].mxu0
        %607 = vmatprep.mubr.f32.mxu0 0.0
        %608 = vmatmul.mubr.f32.gmra.mrb[0].mxu0 %v494
        %v609 = vpop.f32.mrb[0].mxu0
        %v610 = vadd.f32 %v417, %v609
        %v611 = vpop.f32.mrb[0].mxu0
        %612 = vmatprep.mubr.f32.mxu0 0.0
        %613 = vmatmul.mubr.f32.gmra.mrb[0].mxu0 %v497
        %v614 = vpop.f32.mrb[0].mxu0
        %v615 = vadd.f32 %v422, %v614
        %v616 = vpop.f32.mrb[0].mxu0
        %617 = vmatprep.mubr.f32.mxu0 0.0
        %618 = vmatmul.mubr.f32.gmra.mrb[0].mxu0 %v500
        %v619 = vpop.f32.mrb[0].mxu0
        %v620 = vadd.f32 %v427, %v619
        %v621 = vpop.f32.mrb[0].mxu0
        %622 = vmatprep.mubr.f32.mxu0 0.0
        %623 = vmatmul.mubr.f32.gmra.mrb[0].mxu0 %v503
        %v624 = vpop.f32.mrb[0].mxu0
        %v625 = vadd.f32 %v432, %v624
        %v626 = vpop.f32.mrb[0].mxu0
        %627 = vmatprep.mubr.f32.mxu0 0.0
        %628 = vmatmul.mubr.f32.gmra.mrb[0].mxu0 %v506
        %v629 = vpop.f32.mrb[0].mxu0
        %v630 = vadd.f32 %v437, %v629
        %v631 = vpop.f32.mrb[0].mxu0
        %632 = vmatprep.mubr.f32.mxu0 0.0
        %633 = vmatmul.mubr.f32.gmra.mrb[0].mxu0 %v509
        %v634 = vpop.f32.mrb[0].mxu0
        %v635 = vadd.f32 %v442, %v634
        %v636 = vpop.f32.mrb[0].mxu0
        %637 = vmatprep.mubr.f32.mxu0 0.0
        %638 = vmatmul.mubr.f32.gmra.mrb[0].mxu0 %v512
        %v639 = vpop.f32.mrb[0].mxu0
        %v640 = vadd.f32 %v447, %v639
        %v641 = vpop.f32.mrb[0].mxu0
        %642 = vmatprep.mubr.f32.mxu0 0.0
        %643 = vmatmul.mubr.f32.gmra.mrb[0].mxu0 %v515
        %v644 = vpop.f32.mrb[0].mxu0
        %v645 = vadd.f32 %v452, %v644
        %v646 = vpop.f32.mrb[0].mxu0
        %647 = vmatprep.mubr.f32.mxu0 0.0
        %648 = vmatmul.mubr.f32.gmra.mrb[0].mxu0 %v518
        %v649 = vpop.f32.mrb[0].mxu0
        %v650 = vadd.f32 %v457, %v649
        %v651 = vpop.f32.mrb[0].mxu0
        %652 = vmatprep.mubr.f32.mxu0 0.0
        %653 = vmatmul.mubr.f32.gmra.mrb[0].mxu0 %v521
        %v654 = vpop.f32.mrb[0].mxu0
        %v655 = vadd.f32 %v462, %v654
        %v656 = vpop.f32.mrb[0].mxu0
        %657 = vmatprep.mubr.f32.mxu0 0.0
        %658 = vmatmul.mubr.f32.gmra.mrb[0].mxu0 %v524
        %v659 = vpop.f32.mrb[0].mxu0
        %v660 = vadd.f32 %v467, %v659
        %v661 = vpop.f32.mrb[0].mxu0
        %662 = vmatprep.mubr.f32.mxu0 0.0
        %663 = vmatmul.mubr.f32.gmra.mrb[0].mxu0 %v527
        %v664 = vpop.f32.mrb[0].mxu0
        %v665 = vadd.f32 %v472, %v664
        %v666 = vpop.f32.mrb[0].mxu0
        %667 = vmatprep.mubr.f32.mxu0 0.0
        %668 = vmatmul.mubr.f32.gmra.mrb[0].mxu0 %v530
        %v669 = vpop.f32.mrb[0].mxu0
        %v670 = vadd.f32 %v477, %v669
        %v671 = vpop.f32.mrb[0].mxu0
        %672 = vmatprep.mubr.f32.mxu0 0.0
        %673 = vmatmul.mubr.f32.gmra.mrb[0].mxu0 %v533
        %v674 = vpop.f32.mrb[0].mxu0
        %v675 = vadd.f32 %v482, %v674
        %v676 = vpop.f32.mrb[0].mxu0
        %677 = vmatprep.mubr.f32.mxu0 0.0
        %678 = vmatmul.mubr.f32.gmra.mrb[0].mxu0 %v536
        %v679 = vpop.f32.mrb[0].mxu0
        %v680 = vadd.f32 %v487, %v679
        %v681 = vpop.f32.mrb[0].mxu0
        %682 = vdwg.mxu0
        %v683 = vld [vmem:[%s4] sm:$0x1]
        %v685 = vlaneseq
        %v686 = vshrl.u32 %v685, 7
        %v687 = vsub.s32 0, %v686
        %v688 = vrot.slane %v683, %v687
        %v690 = vadd.f32 %v605, %v688
        %v691 = vadd.f32 %v610, %v688
        %v692 = vadd.f32 %v615, %v688
        %v693 = vadd.f32 %v620, %v688
        %v694 = vadd.f32 %v625, %v688
        %v695 = vadd.f32 %v630, %v688
        %v696 = vadd.f32 %v635, %v688
        %v697 = vadd.f32 %v640, %v688
        %v698 = vadd.f32 %v645, %v688
        %v699 = vadd.f32 %v650, %v688
        %v700 = vadd.f32 %v655, %v688
        %v701 = vadd.f32 %v660, %v688
        %v702 = vadd.f32 %v665, %v688
        %v703 = vadd.f32 %v670, %v688
        %v704 = vadd.f32 %v675, %v688
        %v705 = vadd.f32 %v680, %v688
        %vm706 = vcmp.ge.f32.partialorder %v690, 0.0
        %vm707 = vcmp.ge.f32.partialorder %v691, 0.0
        %vm708 = vcmp.ge.f32.partialorder %v692, 0.0
        %vm709 = vcmp.ge.f32.partialorder %v693, 0.0
        %vm710 = vcmp.ge.f32.partialorder %v694, 0.0
        %vm711 = vcmp.ge.f32.partialorder %v695, 0.0
        %vm712 = vcmp.ge.f32.partialorder %v696, 0.0
        %vm713 = vcmp.ge.f32.partialorder %v697, 0.0
        %vm714 = vcmp.ge.f32.partialorder %v698, 0.0
        %vm715 = vcmp.ge.f32.partialorder %v699, 0.0
        %vm716 = vcmp.ge.f32.partialorder %v700, 0.0
        %vm717 = vcmp.ge.f32.partialorder %v701, 0.0
        %vm718 = vcmp.ge.f32.partialorder %v702, 0.0
        %vm719 = vcmp.ge.f32.partialorder %v703, 0.0
        %vm720 = vcmp.ge.f32.partialorder %v704, 0.0
        %vm721 = vcmp.ge.f32.partialorder %v705, 0.0
        %v722 = vmul.f32 %v690, 0.2
        %v723 = vmul.f32 %v691, 0.2
        %v724 = vmul.f32 %v692, 0.2
        %v725 = vmul.f32 %v693, 0.2
        %v726 = vmul.f32 %v694, 0.2
        %v727 = vmul.f32 %v695, 0.2
        %v728 = vmul.f32 %v696, 0.2
        %v729 = vmul.f32 %v697, 0.2
        %v730 = vmul.f32 %v698, 0.2
        %v731 = vmul.f32 %v699, 0.2
        %v732 = vmul.f32 %v700, 0.2
        %v733 = vmul.f32 %v701, 0.2
        %v734 = vmul.f32 %v702, 0.2
        %v735 = vmul.f32 %v703, 0.2
        %v736 = vmul.f32 %v704, 0.2
        %v737 = vmul.f32 %v705, 0.2
        %v738 = vsel %vm706, %v690, %v722
        %v739 = vsel %vm707, %v691, %v723
        %v740 = vsel %vm708, %v692, %v724
        %v741 = vsel %vm709, %v693, %v725
        %v742 = vsel %vm710, %v694, %v726
        %v743 = vsel %vm711, %v695, %v727
        %v744 = vsel %vm712, %v696, %v728
        %v745 = vsel %vm713, %v697, %v729
        %v746 = vsel %vm714, %v698, %v730
        %v747 = vsel %vm715, %v699, %v731
        %v748 = vsel %vm716, %v700, %v732
        %v749 = vsel %vm717, %v701, %v733
        %v750 = vsel %vm718, %v702, %v734
        %v751 = vsel %vm719, %v703, %v735
        %v752 = vsel %vm720, %v704, %v736
        %v753 = vsel %vm721, %v705, %v737
        %754 = vst [vmem:[%s234] sm:$0xff] %v738
        %755 = vst [vmem:[%s234 + $0x8] sm:$0xff] %v739
        %756 = vst [vmem:[%s234 + $0x10] sm:$0xff] %v740
        %757 = vst [vmem:[%s234 + $0x18] sm:$0xff] %v741
        %758 = vst [vmem:[%s234 + $0x20] sm:$0xff] %v742
        %759 = vst [vmem:[%s234 + $0x28] sm:$0xff] %v743
        %760 = vst [vmem:[%s234 + $0x30] sm:$0xff] %v744
        %761 = vst [vmem:[%s234 + $0x38] sm:$0xff] %v745
        %762 = vst [vmem:[%s234 + $0x40] sm:$0xff] %v746
        %763 = vst [vmem:[%s234 + $0x48] sm:$0xff] %v747
        %764 = vst [vmem:[%s234 + $0x50] sm:$0xff] %v748
        %765 = vst [vmem:[%s234 + $0x58] sm:$0xff] %v749
        %766 = vst [vmem:[%s234 + $0x60] sm:$0xff] %v750
        %767 = vst [vmem:[%s234 + $0x68] sm:$0xff] %v751
        %768 = vst [vmem:[%s234 + $0x70] sm:$0xff] %v752
        %769 = vst [vmem:[%s234 + $0x78] sm:$0xff] %v753
        %s770 = sand.u32 %s142, 1
        %s771 = scalar_lea.sflag [#allocation3], %s770
        %s772 = sand.u32 %s142, 1
        %s773 = smul.addr %s772, 128
        %s774 = scalar_lea.vmem [#allocation2], %s773
        // Predicated region
        $region41: #{tpu_custom_call.1} parent=39 // pred_check
          %p775 = pneg %p152
        $region42: #{tpu_custom_call.1} parent=39 // pred_check_branch
          %777 = sbr.rel (%p775) target = $region44
        $region43: #{tpu_custom_call.1} parent=39 // pred_region
          %s778 = smul.u32 16, %s19
          %s780 = ssub.s32 2048, 2048
          %781 = vsyncadd %s771, %s780
          %s782 = smul.addr %s778, 128
          %s783 = scalar_lea.hbm %s5, %s782
          %s784 = sshll.u32 %s774, 4
          %s785 = int_to_ptr.vmem [resolvable:$true] %s784
          %790 = dma.vmem_to_hbm [thread:$0]  %s785, 2048, %s783, %s771, 128, 128, 8
        $region44: #{tpu_custom_call.1} parent=39 // pred_fallthru
          _
      $region40: #{tpu_custom_call.1} parent=5 // pred_fallthru
        _
      %p791 = scmp.le.s32.totalorder 2, %s14
      // Predicated region
      $region45: #{tpu_custom_call.1} parent=5 // pred_check
        %p792 = pneg %p791
      $region46: #{tpu_custom_call.1} parent=5 // pred_check_branch
        %794 = sbr.rel (%p792) target = $region48
      $region47: #{tpu_custom_call.1} parent=5 // pred_region
        %s795 = ssub.s32 %s14, 2
        // Predicated region
        $region49: #{tpu_custom_call.1} parent=47 // pred_check
          %p796 = pneg %p158
        $region50: #{tpu_custom_call.1} parent=47 // pred_check_branch
          %798 = sbr.rel (%p796) target = $region52
        $region51: #{tpu_custom_call.1} parent=47 // pred_region
          %s799 = sand.u32 %s143, 1
          %s800 = scalar_lea.sflag [#allocation3], %s799
          %s801 = sand.u32 %s143, 1
          %s802 = smul.addr %s801, 128
          %s803 = scalar_lea.vmem [#allocation2], %s802
          %804 = dma.done %s800, 2048
        $region52: #{tpu_custom_call.1} parent=47 // pred_fallthru
          _
      $region48: #{tpu_custom_call.1} parent=5 // pred_fallthru
        _
    $region6: #{tpu_custom_call.1} parent=1 // loop_footer
      %s18 = sadd.s32 1, %s14
    $region7: #{tpu_custom_call.1} parent=1 // loop_footer_branch
      %13 = sbr.rel target = $region3
    $region8: #{tpu_custom_call.1} parent=1 // loop_exit
      _
    %805 = vsyncpa [#allocation3], 1
    %s806 = scalar_lea.sflag [#allocation3], 1
    %807 = vsyncpa %s806, 1

</llo_original>
